<compile_context>
chip_gen: v6e
topology: v6e:2x2x1
jax: 0.10.0
libtpu: 0.0.40
codegen_flags: <defaults>
</compile_context>

<pallas_src>
import jax
import jax.numpy as jnp
from jax.experimental import pallas as pl
from jax.experimental.pallas import tpu as pltpu

EPS = 1e-5
KSIZE = 7
POOL = 4


def down_kernel(x_ref, pool_ref,
                w1_ref, g1_ref, be1_ref,
                w2_ref, g2_ref, be2_ref,
                o_ref, z1_ref, z2_ref):
    # x_ref:    (N, C_in, L)
    # pool_ref: (L, Lp)              per-batch avg-pool matrix (entries 1/4)
    # w1_ref:   (C_out, 7*C_in)      fused conv1 weight, Wf[o, k*C_in + c] = W[o, c, k]
    # w2_ref:   (C_out, 7*C_out)     fused conv2 weight
    # g/be:     (C_out, 1)           BN gamma / beta
    # o_ref:    (N, C_out, Lp)
    # z1/z2:    (7*C_in, Lp) / (7*C_out, Lp)   VMEM scratch: stacked shifted copies
    n_batch = x_ref.shape[0]
    lp = pool_ref.shape[1]
    half = KSIZE // 2

    # Out-of-window rows/cols of the shifted stacks are zero for every batch element,
    # so zero the scratch once and only rewrite the valid windows below.
    z1_ref[...] = jnp.zeros_like(z1_ref)
    z2_ref[...] = jnp.zeros_like(z2_ref)

    def conv(h, w_ref, z_ref):
        # h: (C, Lp).  Build the (7*C, Lp) stack of shifted, zero-padded copies of h with
        # static lane-window slice stores (no shift matmuls), then one fused MXU matmul.
        c = h.shape[0]
        for k in range(KSIZE):
            s = k - half                      # tap offset in [-3, 3]; lane l reads h[:, l+s]
            r0 = k * c
            if s == 0:
                z_ref[r0:r0 + c, :] = h
            elif s > 0:
                z_ref[r0:r0 + c, 0:lp - s] = h[:, s:lp]
            else:
                z_ref[r0:r0 + c, -s:lp] = h[:, 0:lp + s]
        return jnp.dot(w_ref[...], z_ref[...], preferred_element_type=jnp.float32)

    def bn_relu(cs, g_ref, be_ref):
        # Training-mode BatchNorm1d (biased variance) over all (batch, length) positions;
        # single-pass sum / sum-of-squares in f32.  The conv bias is omitted upstream
        # because the mean subtraction cancels it exactly.
        inv_n = 1.0 / float(n_batch * lp)
        s = cs[0].sum(axis=1, keepdims=True)
        ss = (cs[0] * cs[0]).sum(axis=1, keepdims=True)
        for t in cs[1:]:
            s = s + t.sum(axis=1, keepdims=True)
            ss = ss + (t * t).sum(axis=1, keepdims=True)
        mean = s * inv_n
        var = jnp.maximum(ss * inv_n - mean * mean, 0.0)
        scale = g_ref[...] * jax.lax.rsqrt(var + EPS)
        shift = be_ref[...] - mean * scale
        return [jnp.maximum(t * scale + shift, 0.0) for t in cs]

    pool = pool_ref[...]
    # AvgPool1d(kernel=4, stride=4): tiny exact matmul per batch element.
    xp = [jnp.dot(x_ref[n], pool, preferred_element_type=jnp.float32)
          for n in range(n_batch)]

    h1 = bn_relu([conv(xp[n], w1_ref, z1_ref) for n in range(n_batch)], g1_ref, be1_ref)
    h2 = bn_relu([conv(h1[n], w2_ref, z2_ref) for n in range(n_batch)], g2_ref, be2_ref)
    for n in range(n_batch):
        o_ref[n] = h2[n]


@jax.jit
def down_forward(x, w1, b1, g1, be1, w2, b2, g2, be2):
    # b1 / b2 are accepted for interface parity with the PyTorch module but unused:
    # with training-mode BatchNorm the conv bias is exactly cancelled by the mean.
    del b1, b2
    N, C_in, L = x.shape
    assert L % POOL == 0, "AvgPool1d(k=4, s=4) path assumes L % 4 == 0"
    Lp = L // POOL
    C_out = w1.shape[0]

    # (L, Lp) average-pool matrix, entries 1/POOL (exact in f32).
    pool = (jnp.kron(jnp.eye(Lp, dtype=jnp.float32),
                     jnp.ones((POOL, 1), dtype=jnp.float32)) / POOL)

    # Fused tap-major weights: Wf[o, k*C + c] = W[o, c, k].
    w1f = jnp.transpose(w1, (0, 2, 1)).reshape(C_out, KSIZE * C_in).astype(jnp.float32)
    w2f = jnp.transpose(w2, (0, 2, 1)).reshape(C_out, KSIZE * C_out).astype(jnp.float32)
    col = lambda v: v.reshape(C_out, 1).astype(jnp.float32)

    # Scoped-VMEM limit sized from the actual operand footprint (+ generous padding /
    # double-buffer headroom); stays inside every chip's limits, incl. v5e's default.
    est_bytes = 4 * (x.size + pool.size + w1f.size + w2f.size + 4 * C_out
                     + N * C_out * Lp + KSIZE * (C_in + C_out) * Lp)
    vmem_limit = int(min(max(4 * est_bytes, 8 * 1024 * 1024), 64 * 1024 * 1024))

    return pl.pallas_call(
        down_kernel,
        out_shape=jax.ShapeDtypeStruct((N, C_out, Lp), jnp.float32),
        in_specs=[pl.BlockSpec(memory_space=pltpu.MemorySpace.VMEM)] * 8,
        out_specs=pl.BlockSpec(memory_space=pltpu.MemorySpace.VMEM),
        scratch_shapes=[pltpu.VMEM((KSIZE * C_in, Lp), jnp.float32),
                        pltpu.VMEM((KSIZE * C_out, Lp), jnp.float32)],
        compiler_params=pltpu.CompilerParams(vmem_limit_bytes=vmem_limit),
    )(x.astype(jnp.float32), pool, w1f, col(g1), col(be1), w2f, col(g2), col(be2))


def reference_forward(x, w1, b1, g1, be1, w2, b2, g2, be2):
    """Pure-JAX reference mirroring PyTorch Down.forward (training-mode BN, with bias)."""
    N, C_in, L = x.shape
    h = x.reshape(N, C_in, L // POOL, POOL).mean(axis=-1)

    def block(h, w, b, g, be):
        y = jax.lax.conv_general_dilated(
            h, w, window_strides=(1,), padding=[(3, 3)],
            dimension_numbers=('NCH', 'OIH', 'NCH'))
        y = y + b[None, :, None]
        mean = y.mean(axis=(0, 2), keepdims=True)
        var = ((y - mean) ** 2).mean(axis=(0, 2), keepdims=True)
        y = (y - mean) / jnp.sqrt(var + EPS) * g[None, :, None] + be[None, :, None]
        return jnp.maximum(y, 0.0)

    h = block(h, w1, b1, g1, be1)
    h = block(h, w2, b2, g2, be2)
    return h


if __name__ == "__main__":
    # Small shapes consistent with the module: batch=2, in_channels=4,
    # out_channels=8, length=64 (pooled length 16).
    N, C_in, C_out, L = 2, 4, 8, 64

    key = jax.random.PRNGKey(0)
    kx, k1, k2, k3, k4 = jax.random.split(key, 5)

    x = jax.random.normal(kx, (N, C_in, L), dtype=jnp.float32)

    lim1 = 1.0 / jnp.sqrt(C_in * KSIZE)
    w1 = jax.random.uniform(k1, (C_out, C_in, KSIZE), minval=-lim1, maxval=lim1)
    b1 = jax.random.uniform(k2, (C_out,), minval=-lim1, maxval=lim1)
    lim2 = 1.0 / jnp.sqrt(C_out * KSIZE)
    w2 = jax.random.uniform(k3, (C_out, C_out, KSIZE), minval=-lim2, maxval=lim2)
    b2 = jax.random.uniform(k4, (C_out,), minval=-lim2, maxval=lim2)
    g1 = jnp.ones((C_out,), jnp.float32)
    be1 = jnp.zeros((C_out,), jnp.float32)
    g2 = jnp.ones((C_out,), jnp.float32)
    be2 = jnp.zeros((C_out,), jnp.float32)

    out = jax.block_until_ready(down_forward(x, w1, b1, g1, be1, w2, b2, g2, be2))
    ref = reference_forward(x, w1, b1, g1, be1, w2, b2, g2, be2)

    assert out.shape == (N, C_out, L // POOL), out.shape
    assert jnp.allclose(out, ref, atol=1e-4, rtol=1e-4), float(jnp.abs(out - ref).max())
    print("KERNEL_OK")
</pallas_src>

<mosaic_0001>
module attributes {stable_mosaic.version = 11 : i64} {
  func.func @down_kernel(%arg0: memref<2x4x64xf32, #tpu.memory_space<vmem>>, %arg1: memref<64x16xf32, #tpu.memory_space<vmem>>, %arg2: memref<8x28xf32, #tpu.memory_space<vmem>>, %arg3: memref<8x1xf32, #tpu.memory_space<vmem>>, %arg4: memref<8x1xf32, #tpu.memory_space<vmem>>, %arg5: memref<8x56xf32, #tpu.memory_space<vmem>>, %arg6: memref<8x1xf32, #tpu.memory_space<vmem>>, %arg7: memref<8x1xf32, #tpu.memory_space<vmem>>, %arg8: memref<2x8x16xf32, #tpu.memory_space<vmem>>, %arg9: memref<28x16xf32, #tpu.memory_space<vmem>>, %arg10: memref<56x16xf32, #tpu.memory_space<vmem>>) attributes {dimension_semantics = [], scalar_prefetch = 0 : i64, scratch_operands = 2 : i64, tpu.core_type = #tpu.core_type<tc>} {
    %cst = arith.constant 0.000000e+00 : f32
    %0 = vector.broadcast %cst : f32 to vector<28x16xf32>
    %c0 = arith.constant 0 : index
    %c0_0 = arith.constant 0 : index
    %1 = vector.load %arg9[%c0, %c0_0] : memref<28x16xf32, #tpu.memory_space<vmem>>, vector<28x16xf32>
    tpu.vector_store %arg9[%c0, %c0_0], %0 {strides = array<i32>} : memref<28x16xf32, #tpu.memory_space<vmem>>, vector<28x16xf32>,
    %cst_1 = arith.constant 0.000000e+00 : f32
    %2 = vector.broadcast %cst_1 : f32 to vector<56x16xf32>
    %c0_2 = arith.constant 0 : index
    %c0_3 = arith.constant 0 : index
    %3 = vector.load %arg10[%c0_2, %c0_3] : memref<56x16xf32, #tpu.memory_space<vmem>>, vector<56x16xf32>
    tpu.vector_store %arg10[%c0_2, %c0_3], %2 {strides = array<i32>} : memref<56x16xf32, #tpu.memory_space<vmem>>, vector<56x16xf32>,
    %c0_4 = arith.constant 0 : index
    %c0_5 = arith.constant 0 : index
    %4 = vector.load %arg1[%c0_4, %c0_5] : memref<64x16xf32, #tpu.memory_space<vmem>>, vector<64x16xf32>
    %c0_6 = arith.constant 0 : index
    %c0_7 = arith.constant 0 : index
    %c0_8 = arith.constant 0 : index
    %5 = vector.load %arg0[%c0_6, %c0_7, %c0_8] : memref<2x4x64xf32, #tpu.memory_space<vmem>>, vector<1x4x64xf32>
    %6 = vector.shape_cast %5 : vector<1x4x64xf32> to vector<4x64xf32>
    %cst_9 = arith.constant dense<0.000000e+00> : vector<4x16xf32>
    %7 = tpu.matmul %6, %4, %cst_9 {dimension_numbers = #tpu.dot_dimension_numbers<[1], [0], [0], [1], [0, 0, 1, 1], [], []>} : vector<4x64xf32>, vector<64x16xf32>, vector<4x16xf32> -> vector<4x16xf32>
    %c1 = arith.constant 1 : index
    %c0_10 = arith.constant 0 : index
    %c0_11 = arith.constant 0 : index
    %8 = vector.load %arg0[%c1, %c0_10, %c0_11] : memref<2x4x64xf32, #tpu.memory_space<vmem>>, vector<1x4x64xf32>
    %9 = vector.shape_cast %8 : vector<1x4x64xf32> to vector<4x64xf32>
    %cst_12 = arith.constant dense<0.000000e+00> : vector<4x16xf32>
    %10 = tpu.matmul %9, %4, %cst_12 {dimension_numbers = #tpu.dot_dimension_numbers<[1], [0], [0], [1], [0, 0, 1, 1], [], []>} : vector<4x64xf32>, vector<64x16xf32>, vector<4x16xf32> -> vector<4x16xf32>
    %11 = vector.extract_strided_slice %7 {offsets = [0, 0], sizes = [4, 13], strides = [1, 1]} : vector<4x16xf32> to vector<4x13xf32>
    %c0_13 = arith.constant 0 : index
    %c3 = arith.constant 3 : index
    %12 = vector.load %arg9[%c0_13, %c3] : memref<28x16xf32, #tpu.memory_space<vmem>>, vector<4x13xf32>
    tpu.vector_store %arg9[%c0_13, %c3], %11 {strides = array<i32>} : memref<28x16xf32, #tpu.memory_space<vmem>>, vector<4x13xf32>,
    %13 = vector.extract_strided_slice %7 {offsets = [0, 0], sizes = [4, 14], strides = [1, 1]} : vector<4x16xf32> to vector<4x14xf32>
    %c4 = arith.constant 4 : index
    %c2 = arith.constant 2 : index
    %14 = vector.load %arg9[%c4, %c2] : memref<28x16xf32, #tpu.memory_space<vmem>>, vector<4x14xf32>
    tpu.vector_store %arg9[%c4, %c2], %13 {strides = array<i32>} : memref<28x16xf32, #tpu.memory_space<vmem>>, vector<4x14xf32>,
    %15 = vector.extract_strided_slice %7 {offsets = [0, 0], sizes = [4, 15], strides = [1, 1]} : vector<4x16xf32> to vector<4x15xf32>
    %c8 = arith.constant 8 : index
    %c1_14 = arith.constant 1 : index
    %16 = vector.load %arg9[%c8, %c1_14] : memref<28x16xf32, #tpu.memory_space<vmem>>, vector<4x15xf32>
    tpu.vector_store %arg9[%c8, %c1_14], %15 {strides = array<i32>} : memref<28x16xf32, #tpu.memory_space<vmem>>, vector<4x15xf32>,
    %c12 = arith.constant 12 : index
    %c0_15 = arith.constant 0 : index
    %17 = vector.load %arg9[%c12, %c0_15] : memref<28x16xf32, #tpu.memory_space<vmem>>, vector<4x16xf32>
    tpu.vector_store %arg9[%c12, %c0_15], %7 {strides = array<i32>} : memref<28x16xf32, #tpu.memory_space<vmem>>, vector<4x16xf32>,
    %18 = vector.extract_strided_slice %7 {offsets = [0, 1], sizes = [4, 15], strides = [1, 1]} : vector<4x16xf32> to vector<4x15xf32>
    %c16 = arith.constant 16 : index
    %c0_16 = arith.constant 0 : index
    %19 = vector.load %arg9[%c16, %c0_16] : memref<28x16xf32, #tpu.memory_space<vmem>>, vector<4x15xf32>
    tpu.vector_store %arg9[%c16, %c0_16], %18 {strides = array<i32>} : memref<28x16xf32, #tpu.memory_space<vmem>>, vector<4x15xf32>,
    %20 = vector.extract_strided_slice %7 {offsets = [0, 2], sizes = [4, 14], strides = [1, 1]} : vector<4x16xf32> to vector<4x14xf32>
    %c20 = arith.constant 20 : index
    %c0_17 = arith.constant 0 : index
    %21 = vector.load %arg9[%c20, %c0_17] : memref<28x16xf32, #tpu.memory_space<vmem>>, vector<4x14xf32>
    tpu.vector_store %arg9[%c20, %c0_17], %20 {strides = array<i32>} : memref<28x16xf32, #tpu.memory_space<vmem>>, vector<4x14xf32>,
    %22 = vector.extract_strided_slice %7 {offsets = [0, 3], sizes = [4, 13], strides = [1, 1]} : vector<4x16xf32> to vector<4x13xf32>
    %c24 = arith.constant 24 : index
    %c0_18 = arith.constant 0 : index
    %23 = vector.load %arg9[%c24, %c0_18] : memref<28x16xf32, #tpu.memory_space<vmem>>, vector<4x13xf32>
    tpu.vector_store %arg9[%c24, %c0_18], %22 {strides = array<i32>} : memref<28x16xf32, #tpu.memory_space<vmem>>, vector<4x13xf32>,
    %c0_19 = arith.constant 0 : index
    %c0_20 = arith.constant 0 : index
    %24 = vector.load %arg2[%c0_19, %c0_20] : memref<8x28xf32, #tpu.memory_space<vmem>>, vector<8x28xf32>
    %c0_21 = arith.constant 0 : index
    %c0_22 = arith.constant 0 : index
    %25 = vector.load %arg9[%c0_21, %c0_22] : memref<28x16xf32, #tpu.memory_space<vmem>>, vector<28x16xf32>
    %cst_23 = arith.constant dense<0.000000e+00> : vector<8x16xf32>
    %26 = tpu.matmul %24, %25, %cst_23 {dimension_numbers = #tpu.dot_dimension_numbers<[1], [0], [0], [1], [0, 0, 1, 1], [], []>} : vector<8x28xf32>, vector<28x16xf32>, vector<8x16xf32> -> vector<8x16xf32>
    %27 = vector.extract_strided_slice %10 {offsets = [0, 0], sizes = [4, 13], strides = [1, 1]} : vector<4x16xf32> to vector<4x13xf32>
    %c0_24 = arith.constant 0 : index
    %c3_25 = arith.constant 3 : index
    %28 = vector.load %arg9[%c0_24, %c3_25] : memref<28x16xf32, #tpu.memory_space<vmem>>, vector<4x13xf32>
    tpu.vector_store %arg9[%c0_24, %c3_25], %27 {strides = array<i32>} : memref<28x16xf32, #tpu.memory_space<vmem>>, vector<4x13xf32>,
    %29 = vector.extract_strided_slice %10 {offsets = [0, 0], sizes = [4, 14], strides = [1, 1]} : vector<4x16xf32> to vector<4x14xf32>
    %c4_26 = arith.constant 4 : index
    %c2_27 = arith.constant 2 : index
    %30 = vector.load %arg9[%c4_26, %c2_27] : memref<28x16xf32, #tpu.memory_space<vmem>>, vector<4x14xf32>
    tpu.vector_store %arg9[%c4_26, %c2_27], %29 {strides = array<i32>} : memref<28x16xf32, #tpu.memory_space<vmem>>, vector<4x14xf32>,
    %31 = vector.extract_strided_slice %10 {offsets = [0, 0], sizes = [4, 15], strides = [1, 1]} : vector<4x16xf32> to vector<4x15xf32>
    %c8_28 = arith.constant 8 : index
    %c1_29 = arith.constant 1 : index
    %32 = vector.load %arg9[%c8_28, %c1_29] : memref<28x16xf32, #tpu.memory_space<vmem>>, vector<4x15xf32>
    tpu.vector_store %arg9[%c8_28, %c1_29], %31 {strides = array<i32>} : memref<28x16xf32, #tpu.memory_space<vmem>>, vector<4x15xf32>,
    %c12_30 = arith.constant 12 : index
    %c0_31 = arith.constant 0 : index
    %33 = vector.load %arg9[%c12_30, %c0_31] : memref<28x16xf32, #tpu.memory_space<vmem>>, vector<4x16xf32>
    tpu.vector_store %arg9[%c12_30, %c0_31], %10 {strides = array<i32>} : memref<28x16xf32, #tpu.memory_space<vmem>>, vector<4x16xf32>,
    %34 = vector.extract_strided_slice %10 {offsets = [0, 1], sizes = [4, 15], strides = [1, 1]} : vector<4x16xf32> to vector<4x15xf32>
    %c16_32 = arith.constant 16 : index
    %c0_33 = arith.constant 0 : index
    %35 = vector.load %arg9[%c16_32, %c0_33] : memref<28x16xf32, #tpu.memory_space<vmem>>, vector<4x15xf32>
    tpu.vector_store %arg9[%c16_32, %c0_33], %34 {strides = array<i32>} : memref<28x16xf32, #tpu.memory_space<vmem>>, vector<4x15xf32>,
    %36 = vector.extract_strided_slice %10 {offsets = [0, 2], sizes = [4, 14], strides = [1, 1]} : vector<4x16xf32> to vector<4x14xf32>
    %c20_34 = arith.constant 20 : index
    %c0_35 = arith.constant 0 : index
    %37 = vector.load %arg9[%c20_34, %c0_35] : memref<28x16xf32, #tpu.memory_space<vmem>>, vector<4x14xf32>
    tpu.vector_store %arg9[%c20_34, %c0_35], %36 {strides = array<i32>} : memref<28x16xf32, #tpu.memory_space<vmem>>, vector<4x14xf32>,
    %38 = vector.extract_strided_slice %10 {offsets = [0, 3], sizes = [4, 13], strides = [1, 1]} : vector<4x16xf32> to vector<4x13xf32>
    %c24_36 = arith.constant 24 : index
    %c0_37 = arith.constant 0 : index
    %39 = vector.load %arg9[%c24_36, %c0_37] : memref<28x16xf32, #tpu.memory_space<vmem>>, vector<4x13xf32>
    tpu.vector_store %arg9[%c24_36, %c0_37], %38 {strides = array<i32>} : memref<28x16xf32, #tpu.memory_space<vmem>>, vector<4x13xf32>,
    %c0_38 = arith.constant 0 : index
    %c0_39 = arith.constant 0 : index
    %40 = vector.load %arg2[%c0_38, %c0_39] : memref<8x28xf32, #tpu.memory_space<vmem>>, vector<8x28xf32>
    %c0_40 = arith.constant 0 : index
    %c0_41 = arith.constant 0 : index
    %41 = vector.load %arg9[%c0_40, %c0_41] : memref<28x16xf32, #tpu.memory_space<vmem>>, vector<28x16xf32>
    %cst_42 = arith.constant dense<0.000000e+00> : vector<8x16xf32>
    %42 = tpu.matmul %40, %41, %cst_42 {dimension_numbers = #tpu.dot_dimension_numbers<[1], [0], [0], [1], [0, 0, 1, 1], [], []>} : vector<8x28xf32>, vector<28x16xf32>, vector<8x16xf32> -> vector<8x16xf32>
    %cst_43 = arith.constant dense<0.000000e+00> : vector<8xf32>
    %43 = vector.multi_reduction <add>, %26, %cst_43 [1] : vector<8x16xf32> to vector<8xf32>
    %44 = vector.shape_cast %43 : vector<8xf32> to vector<8x1xf32>
    %45 = arith.mulf %26, %26 : vector<8x16xf32>
    %cst_44 = arith.constant dense<0.000000e+00> : vector<8xf32>
    %46 = vector.multi_reduction <add>, %45, %cst_44 [1] : vector<8x16xf32> to vector<8xf32>
    %47 = vector.shape_cast %46 : vector<8xf32> to vector<8x1xf32>
    %cst_45 = arith.constant dense<0.000000e+00> : vector<8xf32>
    %48 = vector.multi_reduction <add>, %42, %cst_45 [1] : vector<8x16xf32> to vector<8xf32>
    %49 = vector.shape_cast %48 : vector<8xf32> to vector<8x1xf32>
    %50 = arith.addf %44, %49 : vector<8x1xf32>
    %51 = arith.mulf %42, %42 : vector<8x16xf32>
    %cst_46 = arith.constant dense<0.000000e+00> : vector<8xf32>
    %52 = vector.multi_reduction <add>, %51, %cst_46 [1] : vector<8x16xf32> to vector<8xf32>
    %53 = vector.shape_cast %52 : vector<8xf32> to vector<8x1xf32>
    %54 = arith.addf %47, %53 : vector<8x1xf32>
    %cst_47 = arith.constant 3.125000e-02 : f32
    %55 = vector.broadcast %cst_47 : f32 to vector<8x1xf32>
    %56 = arith.mulf %50, %55 : vector<8x1xf32>
    %cst_48 = arith.constant 3.125000e-02 : f32
    %57 = vector.broadcast %cst_48 : f32 to vector<8x1xf32>
    %58 = arith.mulf %54, %57 : vector<8x1xf32>
    %59 = arith.mulf %56, %56 : vector<8x1xf32>
    %60 = arith.subf %58, %59 : vector<8x1xf32>
    %cst_49 = arith.constant 0.000000e+00 : f32
    %61 = vector.broadcast %cst_49 : f32 to vector<8x1xf32>
    %62 = arith.maximumf %60, %61 : vector<8x1xf32>
    %c0_50 = arith.constant 0 : index
    %c0_51 = arith.constant 0 : index
    %63 = vector.load %arg3[%c0_50, %c0_51] : memref<8x1xf32, #tpu.memory_space<vmem>>, vector<8x1xf32>
    %cst_52 = arith.constant 9.99999974E-6 : f32
    %64 = vector.broadcast %cst_52 : f32 to vector<8x1xf32>
    %65 = arith.addf %62, %64 : vector<8x1xf32>
    %66 = math.rsqrt %65 : vector<8x1xf32>
    %67 = arith.mulf %63, %66 : vector<8x1xf32>
    %c0_53 = arith.constant 0 : index
    %c0_54 = arith.constant 0 : index
    %68 = vector.load %arg4[%c0_53, %c0_54] : memref<8x1xf32, #tpu.memory_space<vmem>>, vector<8x1xf32>
    %69 = arith.mulf %56, %67 : vector<8x1xf32>
    %70 = arith.subf %68, %69 : vector<8x1xf32>
    %71 = vector.broadcast %67 : vector<8x1xf32> to vector<8x16xf32>
    %72 = arith.mulf %26, %71 : vector<8x16xf32>
    %73 = vector.broadcast %70 : vector<8x1xf32> to vector<8x16xf32>
    %74 = arith.addf %72, %73 : vector<8x16xf32>
    %cst_55 = arith.constant 0.000000e+00 : f32
    %75 = vector.broadcast %cst_55 : f32 to vector<8x16xf32>
    %76 = arith.maximumf %74, %75 : vector<8x16xf32>
    %77 = vector.broadcast %67 : vector<8x1xf32> to vector<8x16xf32>
    %78 = arith.mulf %42, %77 : vector<8x16xf32>
    %79 = vector.broadcast %70 : vector<8x1xf32> to vector<8x16xf32>
    %80 = arith.addf %78, %79 : vector<8x16xf32>
    %cst_56 = arith.constant 0.000000e+00 : f32
    %81 = vector.broadcast %cst_56 : f32 to vector<8x16xf32>
    %82 = arith.maximumf %80, %81 : vector<8x16xf32>
    %83 = vector.extract_strided_slice %76 {offsets = [0, 0], sizes = [8, 13], strides = [1, 1]} : vector<8x16xf32> to vector<8x13xf32>
    %c0_57 = arith.constant 0 : index
    %c3_58 = arith.constant 3 : index
    %84 = vector.load %arg10[%c0_57, %c3_58] : memref<56x16xf32, #tpu.memory_space<vmem>>, vector<8x13xf32>
    tpu.vector_store %arg10[%c0_57, %c3_58], %83 {strides = array<i32>} : memref<56x16xf32, #tpu.memory_space<vmem>>, vector<8x13xf32>,
    %85 = vector.extract_strided_slice %76 {offsets = [0, 0], sizes = [8, 14], strides = [1, 1]} : vector<8x16xf32> to vector<8x14xf32>
    %c8_59 = arith.constant 8 : index
    %c2_60 = arith.constant 2 : index
    %86 = vector.load %arg10[%c8_59, %c2_60] : memref<56x16xf32, #tpu.memory_space<vmem>>, vector<8x14xf32>
    tpu.vector_store %arg10[%c8_59, %c2_60], %85 {strides = array<i32>} : memref<56x16xf32, #tpu.memory_space<vmem>>, vector<8x14xf32>,
    %87 = vector.extract_strided_slice %76 {offsets = [0, 0], sizes = [8, 15], strides = [1, 1]} : vector<8x16xf32> to vector<8x15xf32>
    %c16_61 = arith.constant 16 : index
    %c1_62 = arith.constant 1 : index
    %88 = vector.load %arg10[%c16_61, %c1_62] : memref<56x16xf32, #tpu.memory_space<vmem>>, vector<8x15xf32>
    tpu.vector_store %arg10[%c16_61, %c1_62], %87 {strides = array<i32>} : memref<56x16xf32, #tpu.memory_space<vmem>>, vector<8x15xf32>,
    %c24_63 = arith.constant 24 : index
    %c0_64 = arith.constant 0 : index
    %89 = vector.load %arg10[%c24_63, %c0_64] : memref<56x16xf32, #tpu.memory_space<vmem>>, vector<8x16xf32>
    tpu.vector_store %arg10[%c24_63, %c0_64], %76 {strides = array<i32>} : memref<56x16xf32, #tpu.memory_space<vmem>>, vector<8x16xf32>,
    %90 = vector.extract_strided_slice %76 {offsets = [0, 1], sizes = [8, 15], strides = [1, 1]} : vector<8x16xf32> to vector<8x15xf32>
    %c32 = arith.constant 32 : index
    %c0_65 = arith.constant 0 : index
    %91 = vector.load %arg10[%c32, %c0_65] : memref<56x16xf32, #tpu.memory_space<vmem>>, vector<8x15xf32>
    tpu.vector_store %arg10[%c32, %c0_65], %90 {strides = array<i32>} : memref<56x16xf32, #tpu.memory_space<vmem>>, vector<8x15xf32>,
    %92 = vector.extract_strided_slice %76 {offsets = [0, 2], sizes = [8, 14], strides = [1, 1]} : vector<8x16xf32> to vector<8x14xf32>
    %c40 = arith.constant 40 : index
    %c0_66 = arith.constant 0 : index
    %93 = vector.load %arg10[%c40, %c0_66] : memref<56x16xf32, #tpu.memory_space<vmem>>, vector<8x14xf32>
    tpu.vector_store %arg10[%c40, %c0_66], %92 {strides = array<i32>} : memref<56x16xf32, #tpu.memory_space<vmem>>, vector<8x14xf32>,
    %94 = vector.extract_strided_slice %76 {offsets = [0, 3], sizes = [8, 13], strides = [1, 1]} : vector<8x16xf32> to vector<8x13xf32>
    %c48 = arith.constant 48 : index
    %c0_67 = arith.constant 0 : index
    %95 = vector.load %arg10[%c48, %c0_67] : memref<56x16xf32, #tpu.memory_space<vmem>>, vector<8x13xf32>
    tpu.vector_store %arg10[%c48, %c0_67], %94 {strides = array<i32>} : memref<56x16xf32, #tpu.memory_space<vmem>>, vector<8x13xf32>,
    %c0_68 = arith.constant 0 : index
    %c0_69 = arith.constant 0 : index
    %96 = vector.load %arg5[%c0_68, %c0_69] : memref<8x56xf32, #tpu.memory_space<vmem>>, vector<8x56xf32>
    %c0_70 = arith.constant 0 : index
    %c0_71 = arith.constant 0 : index
    %97 = vector.load %arg10[%c0_70, %c0_71] : memref<56x16xf32, #tpu.memory_space<vmem>>, vector<56x16xf32>
    %cst_72 = arith.constant dense<0.000000e+00> : vector<8x16xf32>
    %98 = tpu.matmul %96, %97, %cst_72 {dimension_numbers = #tpu.dot_dimension_numbers<[1], [0], [0], [1], [0, 0, 1, 1], [], []>} : vector<8x56xf32>, vector<56x16xf32>, vector<8x16xf32> -> vector<8x16xf32>
    %99 = vector.extract_strided_slice %82 {offsets = [0, 0], sizes = [8, 13], strides = [1, 1]} : vector<8x16xf32> to vector<8x13xf32>
    %c0_73 = arith.constant 0 : index
    %c3_74 = arith.constant 3 : index
    %100 = vector.load %arg10[%c0_73, %c3_74] : memref<56x16xf32, #tpu.memory_space<vmem>>, vector<8x13xf32>
    tpu.vector_store %arg10[%c0_73, %c3_74], %99 {strides = array<i32>} : memref<56x16xf32, #tpu.memory_space<vmem>>, vector<8x13xf32>,
    %101 = vector.extract_strided_slice %82 {offsets = [0, 0], sizes = [8, 14], strides = [1, 1]} : vector<8x16xf32> to vector<8x14xf32>
    %c8_75 = arith.constant 8 : index
    %c2_76 = arith.constant 2 : index
    %102 = vector.load %arg10[%c8_75, %c2_76] : memref<56x16xf32, #tpu.memory_space<vmem>>, vector<8x14xf32>
    tpu.vector_store %arg10[%c8_75, %c2_76], %101 {strides = array<i32>} : memref<56x16xf32, #tpu.memory_space<vmem>>, vector<8x14xf32>,
    %103 = vector.extract_strided_slice %82 {offsets = [0, 0], sizes = [8, 15], strides = [1, 1]} : vector<8x16xf32> to vector<8x15xf32>
    %c16_77 = arith.constant 16 : index
    %c1_78 = arith.constant 1 : index
    %104 = vector.load %arg10[%c16_77, %c1_78] : memref<56x16xf32, #tpu.memory_space<vmem>>, vector<8x15xf32>
    tpu.vector_store %arg10[%c16_77, %c1_78], %103 {strides = array<i32>} : memref<56x16xf32, #tpu.memory_space<vmem>>, vector<8x15xf32>,
    %c24_79 = arith.constant 24 : index
    %c0_80 = arith.constant 0 : index
    %105 = vector.load %arg10[%c24_79, %c0_80] : memref<56x16xf32, #tpu.memory_space<vmem>>, vector<8x16xf32>
    tpu.vector_store %arg10[%c24_79, %c0_80], %82 {strides = array<i32>} : memref<56x16xf32, #tpu.memory_space<vmem>>, vector<8x16xf32>,
    %106 = vector.extract_strided_slice %82 {offsets = [0, 1], sizes = [8, 15], strides = [1, 1]} : vector<8x16xf32> to vector<8x15xf32>
    %c32_81 = arith.constant 32 : index
    %c0_82 = arith.constant 0 : index
    %107 = vector.load %arg10[%c32_81, %c0_82] : memref<56x16xf32, #tpu.memory_space<vmem>>, vector<8x15xf32>
    tpu.vector_store %arg10[%c32_81, %c0_82], %106 {strides = array<i32>} : memref<56x16xf32, #tpu.memory_space<vmem>>, vector<8x15xf32>,
    %108 = vector.extract_strided_slice %82 {offsets = [0, 2], sizes = [8, 14], strides = [1, 1]} : vector<8x16xf32> to vector<8x14xf32>
    %c40_83 = arith.constant 40 : index
    %c0_84 = arith.constant 0 : index
    %109 = vector.load %arg10[%c40_83, %c0_84] : memref<56x16xf32, #tpu.memory_space<vmem>>, vector<8x14xf32>
    tpu.vector_store %arg10[%c40_83, %c0_84], %108 {strides = array<i32>} : memref<56x16xf32, #tpu.memory_space<vmem>>, vector<8x14xf32>,
    %110 = vector.extract_strided_slice %82 {offsets = [0, 3], sizes = [8, 13], strides = [1, 1]} : vector<8x16xf32> to vector<8x13xf32>
    %c48_85 = arith.constant 48 : index
    %c0_86 = arith.constant 0 : index
    %111 = vector.load %arg10[%c48_85, %c0_86] : memref<56x16xf32, #tpu.memory_space<vmem>>, vector<8x13xf32>
    tpu.vector_store %arg10[%c48_85, %c0_86], %110 {strides = array<i32>} : memref<56x16xf32, #tpu.memory_space<vmem>>, vector<8x13xf32>,
    %c0_87 = arith.constant 0 : index
    %c0_88 = arith.constant 0 : index
    %112 = vector.load %arg5[%c0_87, %c0_88] : memref<8x56xf32, #tpu.memory_space<vmem>>, vector<8x56xf32>
    %c0_89 = arith.constant 0 : index
    %c0_90 = arith.constant 0 : index
    %113 = vector.load %arg10[%c0_89, %c0_90] : memref<56x16xf32, #tpu.memory_space<vmem>>, vector<56x16xf32>
    %cst_91 = arith.constant dense<0.000000e+00> : vector<8x16xf32>
    %114 = tpu.matmul %112, %113, %cst_91 {dimension_numbers = #tpu.dot_dimension_numbers<[1], [0], [0], [1], [0, 0, 1, 1], [], []>} : vector<8x56xf32>, vector<56x16xf32>, vector<8x16xf32> -> vector<8x16xf32>
    %cst_92 = arith.constant dense<0.000000e+00> : vector<8xf32>
    %115 = vector.multi_reduction <add>, %98, %cst_92 [1] : vector<8x16xf32> to vector<8xf32>
    %116 = vector.shape_cast %115 : vector<8xf32> to vector<8x1xf32>
    %117 = arith.mulf %98, %98 : vector<8x16xf32>
    %cst_93 = arith.constant dense<0.000000e+00> : vector<8xf32>
    %118 = vector.multi_reduction <add>, %117, %cst_93 [1] : vector<8x16xf32> to vector<8xf32>
    %119 = vector.shape_cast %118 : vector<8xf32> to vector<8x1xf32>
    %cst_94 = arith.constant dense<0.000000e+00> : vector<8xf32>
    %120 = vector.multi_reduction <add>, %114, %cst_94 [1] : vector<8x16xf32> to vector<8xf32>
    %121 = vector.shape_cast %120 : vector<8xf32> to vector<8x1xf32>
    %122 = arith.addf %116, %121 : vector<8x1xf32>
    %123 = arith.mulf %114, %114 : vector<8x16xf32>
    %cst_95 = arith.constant dense<0.000000e+00> : vector<8xf32>
    %124 = vector.multi_reduction <add>, %123, %cst_95 [1] : vector<8x16xf32> to vector<8xf32>
    %125 = vector.shape_cast %124 : vector<8xf32> to vector<8x1xf32>
    %126 = arith.addf %119, %125 : vector<8x1xf32>
    %cst_96 = arith.constant 3.125000e-02 : f32
    %127 = vector.broadcast %cst_96 : f32 to vector<8x1xf32>
    %128 = arith.mulf %122, %127 : vector<8x1xf32>
    %cst_97 = arith.constant 3.125000e-02 : f32
    %129 = vector.broadcast %cst_97 : f32 to vector<8x1xf32>
    %130 = arith.mulf %126, %129 : vector<8x1xf32>
    %131 = arith.mulf %128, %128 : vector<8x1xf32>
    %132 = arith.subf %130, %131 : vector<8x1xf32>
    %cst_98 = arith.constant 0.000000e+00 : f32
    %133 = vector.broadcast %cst_98 : f32 to vector<8x1xf32>
    %134 = arith.maximumf %132, %133 : vector<8x1xf32>
    %c0_99 = arith.constant 0 : index
    %c0_100 = arith.constant 0 : index
    %135 = vector.load %arg6[%c0_99, %c0_100] : memref<8x1xf32, #tpu.memory_space<vmem>>, vector<8x1xf32>
    %cst_101 = arith.constant 9.99999974E-6 : f32
    %136 = vector.broadcast %cst_101 : f32 to vector<8x1xf32>
    %137 = arith.addf %134, %136 : vector<8x1xf32>
    %138 = math.rsqrt %137 : vector<8x1xf32>
    %139 = arith.mulf %135, %138 : vector<8x1xf32>
    %c0_102 = arith.constant 0 : index
    %c0_103 = arith.constant 0 : index
    %140 = vector.load %arg7[%c0_102, %c0_103] : memref<8x1xf32, #tpu.memory_space<vmem>>, vector<8x1xf32>
    %141 = arith.mulf %128, %139 : vector<8x1xf32>
    %142 = arith.subf %140, %141 : vector<8x1xf32>
    %143 = vector.broadcast %139 : vector<8x1xf32> to vector<8x16xf32>
    %144 = arith.mulf %98, %143 : vector<8x16xf32>
    %145 = vector.broadcast %142 : vector<8x1xf32> to vector<8x16xf32>
    %146 = arith.addf %144, %145 : vector<8x16xf32>
    %cst_104 = arith.constant 0.000000e+00 : f32
    %147 = vector.broadcast %cst_104 : f32 to vector<8x16xf32>
    %148 = arith.maximumf %146, %147 : vector<8x16xf32>
    %149 = vector.broadcast %139 : vector<8x1xf32> to vector<8x16xf32>
    %150 = arith.mulf %114, %149 : vector<8x16xf32>
    %151 = vector.broadcast %142 : vector<8x1xf32> to vector<8x16xf32>
    %152 = arith.addf %150, %151 : vector<8x16xf32>
    %cst_105 = arith.constant 0.000000e+00 : f32
    %153 = vector.broadcast %cst_105 : f32 to vector<8x16xf32>
    %154 = arith.maximumf %152, %153 : vector<8x16xf32>
    %c0_106 = arith.constant 0 : index
    %c0_107 = arith.constant 0 : index
    %c0_108 = arith.constant 0 : index
    %155 = vector.load %arg8[%c0_106, %c0_107, %c0_108] : memref<2x8x16xf32, #tpu.memory_space<vmem>>, vector<1x8x16xf32>
    %156 = vector.shape_cast %155 : vector<1x8x16xf32> to vector<8x16xf32>
    %157 = vector.shape_cast %148 : vector<8x16xf32> to vector<1x8x16xf32>
    tpu.vector_store %arg8[%c0_106, %c0_107, %c0_108], %157 {strides = array<i32>} : memref<2x8x16xf32, #tpu.memory_space<vmem>>, vector<1x8x16xf32>,
    %c1_109 = arith.constant 1 : index
    %c0_110 = arith.constant 0 : index
    %c0_111 = arith.constant 0 : index
    %158 = vector.load %arg8[%c1_109, %c0_110, %c0_111] : memref<2x8x16xf32, #tpu.memory_space<vmem>>, vector<1x8x16xf32>
    %159 = vector.shape_cast %158 : vector<1x8x16xf32> to vector<8x16xf32>
    %160 = vector.shape_cast %154 : vector<8x16xf32> to vector<1x8x16xf32>
    tpu.vector_store %arg8[%c1_109, %c0_110, %c0_111], %160 {strides = array<i32>} : memref<2x8x16xf32, #tpu.memory_space<vmem>>, vector<1x8x16xf32>,
    return
  }
}

</mosaic_0001>

<llo_original>
// kernel: down_forward.1
$region0: #{down_forward.1}
  #allocation0 [shape = 'u32[]', space=smem, size = 0x4, offset = 0x4, fixed_abs, tag = 'smem constant byte address 0x4 - core index']
  #allocation1 [shape = 'u32[144,128]{1,0:T(1,128)}', space=vmem, size = 0x12000, scoped, tag = 'internal scratch']
  #allocation2 [shape = 'f32[28,16]{1,0:T(8,128)}', space=vmem, size = 0x4000, scoped, tag = 'scratch operand']
  #allocation3 [shape = 'f32[56,16]{1,0:T(8,128)}', space=vmem, size = 0x7000, scoped, tag = 'scratch operand']
  %s0 = inlined_call_operand.vmem [shape: f32[2,4,64], index: 0, kind: input, shape index: {}]
  %s1 = inlined_call_operand.vmem [shape: f32[64,16], index: 1, kind: input, shape index: {}]
  %s2 = inlined_call_operand.vmem [shape: f32[8,28], index: 2, kind: input, shape index: {}]
  %s3 = inlined_call_operand.vmem [shape: f32[8,1], index: 3, kind: input, shape index: {}]
  %s4 = inlined_call_operand.vmem [shape: f32[8,1], index: 4, kind: input, shape index: {}]
  %s5 = inlined_call_operand.vmem [shape: f32[8,56], index: 5, kind: input, shape index: {}]
  %s6 = inlined_call_operand.vmem [shape: f32[8,1], index: 6, kind: input, shape index: {}]
  %s7 = inlined_call_operand.vmem [shape: f32[8,1], index: 7, kind: input, shape index: {}]
  %s8 = inlined_call_operand.hbm [shape: f32[2,8,16], index: 8, kind: output, shape index: {}]
  %s9 = sld [smem:[#allocation0]]
  $region42: #{down_forward.1} parent=0
    _
  %s11 = ssub.s32 1, %s9
  %s12 = scalar_select 0, %s11, %s9
  $region1: #{down_forward.1} parent=0
    #allocation4 [shape = 'u8[8192]{0}', space=vmem, size = 0x2000, scoped, tag = 'output window, operand 0, single buffered']
    #allocation5 [shape = 's32[1]{0}', space=sflag, size = 0x4, scoped, tag = 'scoped memory for down_forward.1']
    %13 = vsyncpa [#allocation5], 0
    // Predicated region
    $region2: #{down_forward.1} parent=1 // pred_check
      _
    $region3: #{down_forward.1} parent=1 // pred_check_branch
      %15 = sbr.rel (0) target = $region5
    $region4: #{down_forward.1} parent=1 // pred_region
      _
    $region5: #{down_forward.1} parent=1 // pred_fallthru
      _
    // Predicated region
    $region6: #{down_forward.1} parent=1 // pred_check
      _
    $region7: #{down_forward.1} parent=1 // pred_check_branch
      %17 = sbr.rel (0) target = $region9
    $region8: #{down_forward.1} parent=1 // pred_region
      _
    $region9: #{down_forward.1} parent=1 // pred_fallthru
      _
    // Predicated region
    $region10: #{down_forward.1} parent=1 // pred_check
      _
    $region11: #{down_forward.1} parent=1 // pred_check_branch
      %19 = sbr.rel (0) target = $region13
    $region12: #{down_forward.1} parent=1 // pred_region
      _
    $region13: #{down_forward.1} parent=1 // pred_fallthru
      _
    // Predicated region
    $region14: #{down_forward.1} parent=1 // pred_check
      _
    $region15: #{down_forward.1} parent=1 // pred_check_branch
      %21 = sbr.rel (0) target = $region17
    $region16: #{down_forward.1} parent=1 // pred_region
      _
    $region17: #{down_forward.1} parent=1 // pred_fallthru
      _
    // Predicated region
    $region18: #{down_forward.1} parent=1 // pred_check
      _
    $region19: #{down_forward.1} parent=1 // pred_check_branch
      %23 = sbr.rel (0) target = $region21
    $region20: #{down_forward.1} parent=1 // pred_region
      _
    $region21: #{down_forward.1} parent=1 // pred_fallthru
      _
    // Predicated region
    $region22: #{down_forward.1} parent=1 // pred_check
      _
    $region23: #{down_forward.1} parent=1 // pred_check_branch
      %25 = sbr.rel (0) target = $region25
    $region24: #{down_forward.1} parent=1 // pred_region
      _
    $region25: #{down_forward.1} parent=1 // pred_fallthru
      _
    // Predicated region
    $region26: #{down_forward.1} parent=1 // pred_check
      _
    $region27: #{down_forward.1} parent=1 // pred_check_branch
      %27 = sbr.rel (0) target = $region29
    $region28: #{down_forward.1} parent=1 // pred_region
      _
    $region29: #{down_forward.1} parent=1 // pred_fallthru
      _
    // Predicated region
    $region30: #{down_forward.1} parent=1 // pred_check
      _
    $region31: #{down_forward.1} parent=1 // pred_check_branch
      %29 = sbr.rel (0) target = $region33
    $region32: #{down_forward.1} parent=1 // pred_region
      _
    $region33: #{down_forward.1} parent=1 // pred_fallthru
      _
    %vm30 = vcmask 130048
    %31 = vst.msk [vmem:[#allocation2] sm:$0xff] %vm30, 0.0
    %32 = vst.msk [vmem:[#allocation2 + $0x8] sm:$0xff] %vm30, 0.0
    %33 = vst.msk [vmem:[#allocation2 + $0x10] sm:$0xff] %vm30, 0.0
    %vm34 = vcmask 125952
    %35 = vst.msk [vmem:[#allocation2 + $0x18] sm:$0xf] %vm34, 0.0
    %36 = vst.msk [vmem:[#allocation3] sm:$0xff] %vm30, 0.0
    %37 = vst.msk [vmem:[#allocation3 + $0x8] sm:$0xff] %vm30, 0.0
    %38 = vst.msk [vmem:[#allocation3 + $0x10] sm:$0xff] %vm30, 0.0
    %39 = vst.msk [vmem:[#allocation3 + $0x18] sm:$0xff] %vm30, 0.0
    %40 = vst.msk [vmem:[#allocation3 + $0x20] sm:$0xff] %vm30, 0.0
    %41 = vst.msk [vmem:[#allocation3 + $0x28] sm:$0xff] %vm30, 0.0
    %42 = vst.msk [vmem:[#allocation3 + $0x30] sm:$0xff] %vm30, 0.0
    %v43 = vld [vmem:[%s1] sm:$0xff]
    %v44 = vld [vmem:[%s1 + $0x8] sm:$0xff]
    %v45 = vld [vmem:[%s1 + $0x10] sm:$0xff]
    %v46 = vld [vmem:[%s1 + $0x18] sm:$0xff]
    %v47 = vld [vmem:[%s1 + $0x20] sm:$0xff]
    %v48 = vld [vmem:[%s1 + $0x28] sm:$0xff]
    %v49 = vld [vmem:[%s1 + $0x30] sm:$0xff]
    %v50 = vld [vmem:[%s1 + $0x38] sm:$0xff]
    %v51 = vld [vmem:[%s0] sm:$0xf]
    %vm52 = vcmask 523264
    %v54 = vsel %vm52, %v51, 0
    %56 = vmatprep.subr.mxu0 0.0
    %57 = vmatpush1.msra.mxu0 0.0
    %58 = vmatprep.subr.mxu0 0.0
    %59 = vmatpush1.msra.mxu0 0.0
    %60 = vmatprep.subr.mxu0 0.0
    %61 = vmatpush1.msra.mxu0 0.0
    %62 = vmatprep.subr.mxu0 0.0
    %63 = vmatpush1.msra.mxu0 0.0
    %64 = vmatprep.subr.mxu0 0.0
    %65 = vmatpush1.msra.mxu0 0.0
    %66 = vmatprep.subr.mxu0 0.0
    %67 = vmatpush1.msra.mxu0 0.0
    %68 = vmatprep.subr.mxu0 0.0
    %69 = vmatpush1.msra.mxu0 0.0
    %70 = vmatprep.subr.mxu0 0.0
    %71 = vmatpush1.msra.mxu0 0.0
    %72 = vmatprep.subr.mxu0 0.0
    %73 = vmatpush1.msra.mxu0 %v50
    %74 = vmatprep.subr.mxu0 0.0
    %75 = vmatpush1.msra.mxu0 %v49
    %76 = vmatprep.subr.mxu0 0.0
    %77 = vmatpush1.msra.mxu0 %v48
    %78 = vmatprep.subr.mxu0 0.0
    %79 = vmatpush1.msra.mxu0 %v47
    %80 = vmatprep.subr.mxu0 0.0
    %81 = vmatpush1.msra.mxu0 %v46
    %82 = vmatprep.subr.mxu0 0.0
    %83 = vmatpush1.msra.mxu0 %v45
    %84 = vmatprep.subr.mxu0 0.0
    %85 = vmatpush1.msra.mxu0 %v44
    %86 = vmatprep.subr.mxu0 0.0
    %87 = vmatpush1.msra.mxu0 %v43
    %88 = vmatprep.subr.mxu0 0.0
    %89 = vmatpush2.msra.mxu0 0.0
    %90 = vmatprep.subr.mxu0 0.0
    %91 = vmatpush2.msra.mxu0 0.0
    %92 = vmatprep.subr.mxu0 0.0
    %93 = vmatpush2.msra.mxu0 0.0
    %94 = vmatprep.subr.mxu0 0.0
    %95 = vmatpush2.msra.mxu0 0.0
    %96 = vmatprep.subr.mxu0 0.0
    %97 = vmatpush2.msra.mxu0 0.0
    %98 = vmatprep.subr.mxu0 0.0
    %99 = vmatpush2.msra.mxu0 0.0
    %100 = vmatprep.subr.mxu0 0.0
    %101 = vmatpush2.msra.mxu0 0.0
    %102 = vmatprep.subr.mxu0 0.0
    %103 = vmatpush2.msra.mxu0 0.0
    %104 = vmatprep.subr.mxu0 0.0
    %105 = vmatpush2.msra.mxu0 0.0
    %106 = vmatprep.subr.mxu0 0.0
    %107 = vmatpush2.msra.mxu0 0.0
    %108 = vmatprep.subr.mxu0 0.0
    %109 = vmatpush2.msra.mxu0 0.0
    %110 = vmatprep.subr.mxu0 0.0
    %111 = vmatpush2.msra.mxu0 0.0
    %112 = vmatprep.subr.mxu0 0.0
    %113 = vmatpush2.msra.mxu0 0.0
    %114 = vmatprep.subr.mxu0 0.0
    %115 = vmatpush2.msra.mxu0 0.0
    %116 = vmatprep.subr.mxu0 0.0
    %117 = vmatpush2.msra.mxu0 0.0
    %118 = vmatprep.subr.mxu0 0.0
    %119 = vmatpush2.msra.mxu0 0.0
    %120 = vmatprep.mubr.f32.mxu0 0.0
    %121 = vmatmul.mubr.f32.gmra.mxu0 %v54
    %v122 = vpop.f32.mrf.mxu0
    %v123 = vadd.f32 0.0, %v122
    %v124 = vpop.f32.mrf.mxu0
    %125 = vdwg.mxu0
    %s126 = scalar_lea.vmem %s0, 4
    %v127 = vld [vmem:[%s126] sm:$0xf]
    %v129 = vsel %vm52, %v127, 0
    %131 = vmatprep.subr.mxu0 0.0
    %132 = vmatpush1.msra.mxu0 0.0
    %133 = vmatprep.subr.mxu0 0.0
    %134 = vmatpush1.msra.mxu0 0.0
    %135 = vmatprep.subr.mxu0 0.0
    %136 = vmatpush1.msra.mxu0 0.0
    %137 = vmatprep.subr.mxu0 0.0
    %138 = vmatpush1.msra.mxu0 0.0
    %139 = vmatprep.subr.mxu0 0.0
    %140 = vmatpush1.msra.mxu0 0.0
    %141 = vmatprep.subr.mxu0 0.0
    %142 = vmatpush1.msra.mxu0 0.0
    %143 = vmatprep.subr.mxu0 0.0
    %144 = vmatpush1.msra.mxu0 0.0
    %145 = vmatprep.subr.mxu0 0.0
    %146 = vmatpush1.msra.mxu0 0.0
    %147 = vmatprep.subr.mxu0 0.0
    %148 = vmatpush1.msra.mxu0 %v50
    %149 = vmatprep.subr.mxu0 0.0
    %150 = vmatpush1.msra.mxu0 %v49
    %151 = vmatprep.subr.mxu0 0.0
    %152 = vmatpush1.msra.mxu0 %v48
    %153 = vmatprep.subr.mxu0 0.0
    %154 = vmatpush1.msra.mxu0 %v47
    %155 = vmatprep.subr.mxu0 0.0
    %156 = vmatpush1.msra.mxu0 %v46
    %157 = vmatprep.subr.mxu0 0.0
    %158 = vmatpush1.msra.mxu0 %v45
    %159 = vmatprep.subr.mxu0 0.0
    %160 = vmatpush1.msra.mxu0 %v44
    %161 = vmatprep.subr.mxu0 0.0
    %162 = vmatpush1.msra.mxu0 %v43
    %163 = vmatprep.subr.mxu0 0.0
    %164 = vmatpush2.msra.mxu0 0.0
    %165 = vmatprep.subr.mxu0 0.0
    %166 = vmatpush2.msra.mxu0 0.0
    %167 = vmatprep.subr.mxu0 0.0
    %168 = vmatpush2.msra.mxu0 0.0
    %169 = vmatprep.subr.mxu0 0.0
    %170 = vmatpush2.msra.mxu0 0.0
    %171 = vmatprep.subr.mxu0 0.0
    %172 = vmatpush2.msra.mxu0 0.0
    %173 = vmatprep.subr.mxu0 0.0
    %174 = vmatpush2.msra.mxu0 0.0
    %175 = vmatprep.subr.mxu0 0.0
    %176 = vmatpush2.msra.mxu0 0.0
    %177 = vmatprep.subr.mxu0 0.0
    %178 = vmatpush2.msra.mxu0 0.0
    %179 = vmatprep.subr.mxu0 0.0
    %180 = vmatpush2.msra.mxu0 0.0
    %181 = vmatprep.subr.mxu0 0.0
    %182 = vmatpush2.msra.mxu0 0.0
    %183 = vmatprep.subr.mxu0 0.0
    %184 = vmatpush2.msra.mxu0 0.0
    %185 = vmatprep.subr.mxu0 0.0
    %186 = vmatpush2.msra.mxu0 0.0
    %187 = vmatprep.subr.mxu0 0.0
    %188 = vmatpush2.msra.mxu0 0.0
    %189 = vmatprep.subr.mxu0 0.0
    %190 = vmatpush2.msra.mxu0 0.0
    %191 = vmatprep.subr.mxu0 0.0
    %192 = vmatpush2.msra.mxu0 0.0
    %193 = vmatprep.subr.mxu0 0.0
    %194 = vmatpush2.msra.mxu0 0.0
    %195 = vmatprep.mubr.f32.mxu0 0.0
    %196 = vmatmul.mubr.f32.gmra.mxu0 %v129
    %v197 = vpop.f32.mrf.mxu0
    %v198 = vadd.f32 0.0, %v197
    %v199 = vpop.f32.mrf.mxu0
    %200 = vdwg.mxu0
    %202 = vrot.lane.b32.xlu0 %v123, 3
    %v203 = vpop.permute.xlu0 %202
    %vm205 = vcmask 125976
    %206 = vst.msk [vmem:[#allocation2] sm:$0xf] %vm205, %v203
    %207 = vrot.lane.b32.xlu0 %v123, 2
    %v208 = vpop.permute.xlu0 %207
    %vm210 = vcmask 125968
    %211 = vst.msk [vmem:[#allocation2 + $0x4] sm:$0xf] %vm210, %v208
    %212 = vrot.lane.b32.xlu0 %v123, 1
    %v213 = vpop.permute.xlu0 %212
    %vm215 = vcmask 125960
    %216 = vst.msk [vmem:[#allocation2 + $0x8] sm:$0xf] %vm215, %v213
    %217 = vst.msk [vmem:[#allocation2 + $0xc] sm:$0xf] %vm34, %v123
    %218 = vrot.lane.b32.xlu0 %v123, 127
    %v219 = vpop.permute.xlu0 %218
    %vm221 = vcmask 117760
    %222 = vst.msk [vmem:[#allocation2 + $0x10] sm:$0xf] %vm221, %v219
    %223 = vrot.lane.b32.xlu0 %v123, 126
    %v224 = vpop.permute.xlu0 %223
    %vm226 = vcmask 109568
    %227 = vst.msk [vmem:[#allocation2 + $0x14] sm:$0xf] %vm226, %v224
    %228 = vrot.lane.b32.xlu0 %v123, 125
    %v229 = vpop.permute.xlu0 %228
    %vm231 = vcmask 101376
    %232 = vst.msk [vmem:[#allocation2 + $0x18] sm:$0xf] %vm231, %v229
    %v233 = vld [vmem:[%s2] sm:$0xff]
    %v234 = vld [vmem:[#allocation2] sm:$0xff]
    %v235 = vld [vmem:[#allocation2 + $0x8] sm:$0xff]
    %v236 = vld [vmem:[#allocation2 + $0x10] sm:$0xff]
    %v237 = vld [vmem:[#allocation2 + $0x18] sm:$0xf]
    %vm238 = vcmask 228352
    %v240 = vsel %vm238, %v233, 0
    %vm242 = vcmask 1043456
    %v244 = vsel %vm242, %v237, 0
    %246 = vmatprep.subr.mxu0 0.0
    %247 = vmatpush1.msra.mxu0 0.0
    %248 = vmatprep.subr.mxu0 0.0
    %249 = vmatpush1.msra.mxu0 0.0
    %250 = vmatprep.subr.mxu0 0.0
    %251 = vmatpush1.msra.mxu0 0.0
    %252 = vmatprep.subr.mxu0 0.0
    %253 = vmatpush1.msra.mxu0 0.0
    %254 = vmatprep.subr.mxu0 0.0
    %255 = vmatpush1.msra.mxu0 0.0
    %256 = vmatprep.subr.mxu0 0.0
    %257 = vmatpush1.msra.mxu0 0.0
    %258 = vmatprep.subr.mxu0 0.0
    %259 = vmatpush1.msra.mxu0 0.0
    %260 = vmatprep.subr.mxu0 0.0
    %261 = vmatpush1.msra.mxu0 0.0
    %262 = vmatprep.subr.mxu0 0.0
    %263 = vmatpush1.msra.mxu0 0.0
    %264 = vmatprep.subr.mxu0 0.0
    %265 = vmatpush1.msra.mxu0 0.0
    %266 = vmatprep.subr.mxu0 0.0
    %267 = vmatpush1.msra.mxu0 0.0
    %268 = vmatprep.subr.mxu0 0.0
    %269 = vmatpush1.msra.mxu0 0.0
    %270 = vmatprep.subr.mxu0 0.0
    %271 = vmatpush1.msra.mxu0 %v244
    %272 = vmatprep.subr.mxu0 0.0
    %273 = vmatpush1.msra.mxu0 %v236
    %274 = vmatprep.subr.mxu0 0.0
    %275 = vmatpush1.msra.mxu0 %v235
    %276 = vmatprep.subr.mxu0 0.0
    %277 = vmatpush1.msra.mxu0 %v234
    %278 = vmatprep.subr.mxu0 0.0
    %279 = vmatpush2.msra.mxu0 0.0
    %280 = vmatprep.subr.mxu0 0.0
    %281 = vmatpush2.msra.mxu0 0.0
    %282 = vmatprep.subr.mxu0 0.0
    %283 = vmatpush2.msra.mxu0 0.0
    %284 = vmatprep.subr.mxu0 0.0
    %285 = vmatpush2.msra.mxu0 0.0
    %286 = vmatprep.subr.mxu0 0.0
    %287 = vmatpush2.msra.mxu0 0.0
    %288 = vmatprep.subr.mxu0 0.0
    %289 = vmatpush2.msra.mxu0 0.0
    %290 = vmatprep.subr.mxu0 0.0
    %291 = vmatpush2.msra.mxu0 0.0
    %292 = vmatprep.subr.mxu0 0.0
    %293 = vmatpush2.msra.mxu0 0.0
    %294 = vmatprep.subr.mxu0 0.0
    %295 = vmatpush2.msra.mxu0 0.0
    %296 = vmatprep.subr.mxu0 0.0
    %297 = vmatpush2.msra.mxu0 0.0
    %298 = vmatprep.subr.mxu0 0.0
    %299 = vmatpush2.msra.mxu0 0.0
    %300 = vmatprep.subr.mxu0 0.0
    %301 = vmatpush2.msra.mxu0 0.0
    %302 = vmatprep.subr.mxu0 0.0
    %303 = vmatpush2.msra.mxu0 0.0
    %304 = vmatprep.subr.mxu0 0.0
    %305 = vmatpush2.msra.mxu0 0.0
    %306 = vmatprep.subr.mxu0 0.0
    %307 = vmatpush2.msra.mxu0 0.0
    %308 = vmatprep.subr.mxu0 0.0
    %309 = vmatpush2.msra.mxu0 0.0
    %310 = vmatprep.mubr.f32.mxu0 0.0
    %311 = vmatmul.mubr.f32.gmra.mxu0 %v240
    %v312 = vpop.f32.mrf.mxu0
    %v313 = vadd.f32 0.0, %v312
    %v314 = vpop.f32.mrf.mxu0
    %315 = vdwg.mxu0
    %317 = vrot.lane.b32.xlu0 %v198, 3
    %v318 = vpop.permute.xlu0 %317
    %320 = vst.msk [vmem:[#allocation2] sm:$0xf] %vm205, %v318
    %321 = vrot.lane.b32.xlu0 %v198, 2
    %v322 = vpop.permute.xlu0 %321
    %324 = vst.msk [vmem:[#allocation2 + $0x4] sm:$0xf] %vm210, %v322
    %325 = vrot.lane.b32.xlu0 %v198, 1
    %v326 = vpop.permute.xlu0 %325
    %328 = vst.msk [vmem:[#allocation2 + $0x8] sm:$0xf] %vm215, %v326
    %329 = vst.msk [vmem:[#allocation2 + $0xc] sm:$0xf] %vm34, %v198
    %330 = vrot.lane.b32.xlu0 %v198, 127
    %v331 = vpop.permute.xlu0 %330
    %333 = vst.msk [vmem:[#allocation2 + $0x10] sm:$0xf] %vm221, %v331
    %334 = vrot.lane.b32.xlu0 %v198, 126
    %v335 = vpop.permute.xlu0 %334
    %337 = vst.msk [vmem:[#allocation2 + $0x14] sm:$0xf] %vm226, %v335
    %338 = vrot.lane.b32.xlu0 %v198, 125
    %v339 = vpop.permute.xlu0 %338
    %341 = vst.msk [vmem:[#allocation2 + $0x18] sm:$0xf] %vm231, %v339
    %v342 = vld [vmem:[%s2] sm:$0xff]
    %v343 = vld [vmem:[#allocation2] sm:$0xff]
    %v344 = vld [vmem:[#allocation2 + $0x8] sm:$0xff]
    %v345 = vld [vmem:[#allocation2 + $0x10] sm:$0xff]
    %v346 = vld [vmem:[#allocation2 + $0x18] sm:$0xf]
    %v348 = vsel %vm238, %v342, 0
    %v351 = vsel %vm242, %v346, 0
    %353 = vmatprep.subr.mxu0 0.0
    %354 = vmatpush1.msra.mxu0 0.0
    %355 = vmatprep.subr.mxu0 0.0
    %356 = vmatpush1.msra.mxu0 0.0
    %357 = vmatprep.subr.mxu0 0.0
    %358 = vmatpush1.msra.mxu0 0.0
    %359 = vmatprep.subr.mxu0 0.0
    %360 = vmatpush1.msra.mxu0 0.0
    %361 = vmatprep.subr.mxu0 0.0
    %362 = vmatpush1.msra.mxu0 0.0
    %363 = vmatprep.subr.mxu0 0.0
    %364 = vmatpush1.msra.mxu0 0.0
    %365 = vmatprep.subr.mxu0 0.0
    %366 = vmatpush1.msra.mxu0 0.0
    %367 = vmatprep.subr.mxu0 0.0
    %368 = vmatpush1.msra.mxu0 0.0
    %369 = vmatprep.subr.mxu0 0.0
    %370 = vmatpush1.msra.mxu0 0.0
    %371 = vmatprep.subr.mxu0 0.0
    %372 = vmatpush1.msra.mxu0 0.0
    %373 = vmatprep.subr.mxu0 0.0
    %374 = vmatpush1.msra.mxu0 0.0
    %375 = vmatprep.subr.mxu0 0.0
    %376 = vmatpush1.msra.mxu0 0.0
    %377 = vmatprep.subr.mxu0 0.0
    %378 = vmatpush1.msra.mxu0 %v351
    %379 = vmatprep.subr.mxu0 0.0
    %380 = vmatpush1.msra.mxu0 %v345
    %381 = vmatprep.subr.mxu0 0.0
    %382 = vmatpush1.msra.mxu0 %v344
    %383 = vmatprep.subr.mxu0 0.0
    %384 = vmatpush1.msra.mxu0 %v343
    %385 = vmatprep.subr.mxu0 0.0
    %386 = vmatpush2.msra.mxu0 0.0
    %387 = vmatprep.subr.mxu0 0.0
    %388 = vmatpush2.msra.mxu0 0.0
    %389 = vmatprep.subr.mxu0 0.0
    %390 = vmatpush2.msra.mxu0 0.0
    %391 = vmatprep.subr.mxu0 0.0
    %392 = vmatpush2.msra.mxu0 0.0
    %393 = vmatprep.subr.mxu0 0.0
    %394 = vmatpush2.msra.mxu0 0.0
    %395 = vmatprep.subr.mxu0 0.0
    %396 = vmatpush2.msra.mxu0 0.0
    %397 = vmatprep.subr.mxu0 0.0
    %398 = vmatpush2.msra.mxu0 0.0
    %399 = vmatprep.subr.mxu0 0.0
    %400 = vmatpush2.msra.mxu0 0.0
    %401 = vmatprep.subr.mxu0 0.0
    %402 = vmatpush2.msra.mxu0 0.0
    %403 = vmatprep.subr.mxu0 0.0
    %404 = vmatpush2.msra.mxu0 0.0
    %405 = vmatprep.subr.mxu0 0.0
    %406 = vmatpush2.msra.mxu0 0.0
    %407 = vmatprep.subr.mxu0 0.0
    %408 = vmatpush2.msra.mxu0 0.0
    %409 = vmatprep.subr.mxu0 0.0
    %410 = vmatpush2.msra.mxu0 0.0
    %411 = vmatprep.subr.mxu0 0.0
    %412 = vmatpush2.msra.mxu0 0.0
    %413 = vmatprep.subr.mxu0 0.0
    %414 = vmatpush2.msra.mxu0 0.0
    %415 = vmatprep.subr.mxu0 0.0
    %416 = vmatpush2.msra.mxu0 0.0
    %417 = vmatprep.mubr.f32.mxu0 0.0
    %418 = vmatmul.mubr.f32.gmra.mxu0 %v348
    %v419 = vpop.f32.mrf.mxu0
    %v420 = vadd.f32 0.0, %v419
    %v421 = vpop.f32.mrf.mxu0
    %422 = vdwg.mxu0
    %v423 = vsel %vm30, %v313, 0.0
    %424 = vadd.xlane.f32.xlu0 %v423
    %v425 = vpop.xlane.xlu0 %424
    %v426 = vmul.f32 %v313, %v313
    %v427 = vsel %vm30, %v426, 0.0
    %428 = vadd.xlane.f32.xlu0 %v427
    %v429 = vpop.xlane.xlu0 %428
    %v430 = vsel %vm30, %v420, 0.0
    %431 = vadd.xlane.f32.xlu0 %v430
    %v432 = vpop.xlane.xlu0 %431
    %v433 = vadd.f32 %v425, %v432
    %v434 = vmul.f32 %v420, %v420
    %v435 = vsel %vm30, %v434, 0.0
    %436 = vadd.xlane.f32.xlu0 %v435
    %v437 = vpop.xlane.xlu0 %436
    %v438 = vadd.f32 %v429, %v437
    %v439 = vmul.f32 %v433, 0.03125
    %v440 = vmul.f32 %v438, 0.03125
    %v441 = vmul.f32 %v439, %v439
    %v442 = vsub.f32 %v440, %v441
    %v443 = vmax.f32 %v442, 0.0
    %v444 = vld [vmem:[%s3] sm:$0xff]
    %v445 = vadd.f32 %v443, 1e-05
    %v446 = vrsqrt.pop %v445
    %v447 = vmul.f32 %v444, %v446
    %v448 = vld [vmem:[%s4] sm:$0xff]
    %v449 = vmul.f32 %v439, %v447
    %v450 = vsub.f32 %v448, %v449
    %452 = vset.pattern.permute.xlu0 0
    %453 = vperm.xlu0 %452, %v447
    %v454 = vpop.permute.xlu0 %453
    %v456 = vmul.f32 %v313, %v454
    %458 = vset.pattern.permute.xlu0 0
    %459 = vperm.xlu0 %458, %v450
    %v460 = vpop.permute.xlu0 %459
    %v462 = vadd.f32 %v456, %v460
    %v463 = vmax.f32 %v462, 0.0
    %v464 = vmul.f32 %v420, %v454
    %v465 = vadd.f32 %v464, %v460
    %v466 = vmax.f32 %v465, 0.0
    %468 = vrot.lane.b32.xlu0 %v463, 3
    %v469 = vpop.permute.xlu0 %468
    %vm471 = vcmask 130072
    %472 = vst.msk [vmem:[#allocation3] sm:$0xff] %vm471, %v469
    %473 = vrot.lane.b32.xlu0 %v463, 2
    %v474 = vpop.permute.xlu0 %473
    %vm476 = vcmask 130064
    %477 = vst.msk [vmem:[#allocation3 + $0x8] sm:$0xff] %vm476, %v474
    %478 = vrot.lane.b32.xlu0 %v463, 1
    %v479 = vpop.permute.xlu0 %478
    %vm481 = vcmask 130056
    %482 = vst.msk [vmem:[#allocation3 + $0x10] sm:$0xff] %vm481, %v479
    %483 = vst.msk [vmem:[#allocation3 + $0x18] sm:$0xff] %vm30, %v463
    %484 = vrot.lane.b32.xlu0 %v463, 127
    %v485 = vpop.permute.xlu0 %484
    %vm487 = vcmask 121856
    %488 = vst.msk [vmem:[#allocation3 + $0x20] sm:$0xff] %vm487, %v485
    %489 = vrot.lane.b32.xlu0 %v463, 126
    %v490 = vpop.permute.xlu0 %489
    %vm492 = vcmask 113664
    %493 = vst.msk [vmem:[#allocation3 + $0x28] sm:$0xff] %vm492, %v490
    %494 = vrot.lane.b32.xlu0 %v463, 125
    %v495 = vpop.permute.xlu0 %494
    %vm497 = vcmask 105472
    %498 = vst.msk [vmem:[#allocation3 + $0x30] sm:$0xff] %vm497, %v495
    %v499 = vld [vmem:[%s5] sm:$0xff]
    %v500 = vld [vmem:[#allocation3] sm:$0xff]
    %v501 = vld [vmem:[#allocation3 + $0x8] sm:$0xff]
    %v502 = vld [vmem:[#allocation3 + $0x10] sm:$0xff]
    %v503 = vld [vmem:[#allocation3 + $0x18] sm:$0xff]
    %v504 = vld [vmem:[#allocation3 + $0x20] sm:$0xff]
    %v505 = vld [vmem:[#allocation3 + $0x28] sm:$0xff]
    %v506 = vld [vmem:[#allocation3 + $0x30] sm:$0xff]
    %vm507 = vcmask 457728
    %v509 = vsel %vm507, %v499, 0
    %511 = vmatprep.subr.mxu0 0.0
    %512 = vmatpush1.msra.mxu0 0.0
    %513 = vmatprep.subr.mxu0 0.0
    %514 = vmatpush1.msra.mxu0 0.0
    %515 = vmatprep.subr.mxu0 0.0
    %516 = vmatpush1.msra.mxu0 0.0
    %517 = vmatprep.subr.mxu0 0.0
    %518 = vmatpush1.msra.mxu0 0.0
    %519 = vmatprep.subr.mxu0 0.0
    %520 = vmatpush1.msra.mxu0 0.0
    %521 = vmatprep.subr.mxu0 0.0
    %522 = vmatpush1.msra.mxu0 0.0
    %523 = vmatprep.subr.mxu0 0.0
    %524 = vmatpush1.msra.mxu0 0.0
    %525 = vmatprep.subr.mxu0 0.0
    %526 = vmatpush1.msra.mxu0 0.0
    %527 = vmatprep.subr.mxu0 0.0
    %528 = vmatpush1.msra.mxu0 0.0
    %529 = vmatprep.subr.mxu0 0.0
    %530 = vmatpush1.msra.mxu0 %v506
    %531 = vmatprep.subr.mxu0 0.0
    %532 = vmatpush1.msra.mxu0 %v505
    %533 = vmatprep.subr.mxu0 0.0
    %534 = vmatpush1.msra.mxu0 %v504
    %535 = vmatprep.subr.mxu0 0.0
    %536 = vmatpush1.msra.mxu0 %v503
    %537 = vmatprep.subr.mxu0 0.0
    %538 = vmatpush1.msra.mxu0 %v502
    %539 = vmatprep.subr.mxu0 0.0
    %540 = vmatpush1.msra.mxu0 %v501
    %541 = vmatprep.subr.mxu0 0.0
    %542 = vmatpush1.msra.mxu0 %v500
    %543 = vmatprep.subr.mxu0 0.0
    %544 = vmatpush2.msra.mxu0 0.0
    %545 = vmatprep.subr.mxu0 0.0
    %546 = vmatpush2.msra.mxu0 0.0
    %547 = vmatprep.subr.mxu0 0.0
    %548 = vmatpush2.msra.mxu0 0.0
    %549 = vmatprep.subr.mxu0 0.0
    %550 = vmatpush2.msra.mxu0 0.0
    %551 = vmatprep.subr.mxu0 0.0
    %552 = vmatpush2.msra.mxu0 0.0
    %553 = vmatprep.subr.mxu0 0.0
    %554 = vmatpush2.msra.mxu0 0.0
    %555 = vmatprep.subr.mxu0 0.0
    %556 = vmatpush2.msra.mxu0 0.0
    %557 = vmatprep.subr.mxu0 0.0
    %558 = vmatpush2.msra.mxu0 0.0
    %559 = vmatprep.subr.mxu0 0.0
    %560 = vmatpush2.msra.mxu0 0.0
    %561 = vmatprep.subr.mxu0 0.0
    %562 = vmatpush2.msra.mxu0 0.0
    %563 = vmatprep.subr.mxu0 0.0
    %564 = vmatpush2.msra.mxu0 0.0
    %565 = vmatprep.subr.mxu0 0.0
    %566 = vmatpush2.msra.mxu0 0.0
    %567 = vmatprep.subr.mxu0 0.0
    %568 = vmatpush2.msra.mxu0 0.0
    %569 = vmatprep.subr.mxu0 0.0
    %570 = vmatpush2.msra.mxu0 0.0
    %571 = vmatprep.subr.mxu0 0.0
    %572 = vmatpush2.msra.mxu0 0.0
    %573 = vmatprep.subr.mxu0 0.0
    %574 = vmatpush2.msra.mxu0 0.0
    %575 = vmatprep.mubr.f32.mxu0 0.0
    %576 = vmatmul.mubr.f32.gmra.mxu0 %v509
    %v577 = vpop.f32.mrf.mxu0
    %v578 = vadd.f32 0.0, %v577
    %v579 = vpop.f32.mrf.mxu0
    %580 = vdwg.mxu0
    %582 = vrot.lane.b32.xlu0 %v466, 3
    %v583 = vpop.permute.xlu0 %582
    %585 = vst.msk [vmem:[#allocation3] sm:$0xff] %vm471, %v583
    %586 = vrot.lane.b32.xlu0 %v466, 2
    %v587 = vpop.permute.xlu0 %586
    %589 = vst.msk [vmem:[#allocation3 + $0x8] sm:$0xff] %vm476, %v587
    %590 = vrot.lane.b32.xlu0 %v466, 1
    %v591 = vpop.permute.xlu0 %590
    %593 = vst.msk [vmem:[#allocation3 + $0x10] sm:$0xff] %vm481, %v591
    %594 = vst.msk [vmem:[#allocation3 + $0x18] sm:$0xff] %vm30, %v466
    %595 = vrot.lane.b32.xlu0 %v466, 127
    %v596 = vpop.permute.xlu0 %595
    %598 = vst.msk [vmem:[#allocation3 + $0x20] sm:$0xff] %vm487, %v596
    %599 = vrot.lane.b32.xlu0 %v466, 126
    %v600 = vpop.permute.xlu0 %599
    %602 = vst.msk [vmem:[#allocation3 + $0x28] sm:$0xff] %vm492, %v600
    %603 = vrot.lane.b32.xlu0 %v466, 125
    %v604 = vpop.permute.xlu0 %603
    %606 = vst.msk [vmem:[#allocation3 + $0x30] sm:$0xff] %vm497, %v604
    %v607 = vld [vmem:[%s5] sm:$0xff]
    %v608 = vld [vmem:[#allocation3] sm:$0xff]
    %v609 = vld [vmem:[#allocation3 + $0x8] sm:$0xff]
    %v610 = vld [vmem:[#allocation3 + $0x10] sm:$0xff]
    %v611 = vld [vmem:[#allocation3 + $0x18] sm:$0xff]
    %v612 = vld [vmem:[#allocation3 + $0x20] sm:$0xff]
    %v613 = vld [vmem:[#allocation3 + $0x28] sm:$0xff]
    %v614 = vld [vmem:[#allocation3 + $0x30] sm:$0xff]
    %v616 = vsel %vm507, %v607, 0
    %618 = vmatprep.subr.mxu0 0.0
    %619 = vmatpush1.msra.mxu0 0.0
    %620 = vmatprep.subr.mxu0 0.0
    %621 = vmatpush1.msra.mxu0 0.0
    %622 = vmatprep.subr.mxu0 0.0
    %623 = vmatpush1.msra.mxu0 0.0
    %624 = vmatprep.subr.mxu0 0.0
    %625 = vmatpush1.msra.mxu0 0.0
    %626 = vmatprep.subr.mxu0 0.0
    %627 = vmatpush1.msra.mxu0 0.0
    %628 = vmatprep.subr.mxu0 0.0
    %629 = vmatpush1.msra.mxu0 0.0
    %630 = vmatprep.subr.mxu0 0.0
    %631 = vmatpush1.msra.mxu0 0.0
    %632 = vmatprep.subr.mxu0 0.0
    %633 = vmatpush1.msra.mxu0 0.0
    %634 = vmatprep.subr.mxu0 0.0
    %635 = vmatpush1.msra.mxu0 0.0
    %636 = vmatprep.subr.mxu0 0.0
    %637 = vmatpush1.msra.mxu0 %v614
    %638 = vmatprep.subr.mxu0 0.0
    %639 = vmatpush1.msra.mxu0 %v613
    %640 = vmatprep.subr.mxu0 0.0
    %641 = vmatpush1.msra.mxu0 %v612
    %642 = vmatprep.subr.mxu0 0.0
    %643 = vmatpush1.msra.mxu0 %v611
    %644 = vmatprep.subr.mxu0 0.0
    %645 = vmatpush1.msra.mxu0 %v610
    %646 = vmatprep.subr.mxu0 0.0
    %647 = vmatpush1.msra.mxu0 %v609
    %648 = vmatprep.subr.mxu0 0.0
    %649 = vmatpush1.msra.mxu0 %v608
    %650 = vmatprep.subr.mxu0 0.0
    %651 = vmatpush2.msra.mxu0 0.0
    %652 = vmatprep.subr.mxu0 0.0
    %653 = vmatpush2.msra.mxu0 0.0
    %654 = vmatprep.subr.mxu0 0.0
    %655 = vmatpush2.msra.mxu0 0.0
    %656 = vmatprep.subr.mxu0 0.0
    %657 = vmatpush2.msra.mxu0 0.0
    %658 = vmatprep.subr.mxu0 0.0
    %659 = vmatpush2.msra.mxu0 0.0
    %660 = vmatprep.subr.mxu0 0.0
    %661 = vmatpush2.msra.mxu0 0.0
    %662 = vmatprep.subr.mxu0 0.0
    %663 = vmatpush2.msra.mxu0 0.0
    %664 = vmatprep.subr.mxu0 0.0
    %665 = vmatpush2.msra.mxu0 0.0
    %666 = vmatprep.subr.mxu0 0.0
    %667 = vmatpush2.msra.mxu0 0.0
    %668 = vmatprep.subr.mxu0 0.0
    %669 = vmatpush2.msra.mxu0 0.0
    %670 = vmatprep.subr.mxu0 0.0
    %671 = vmatpush2.msra.mxu0 0.0
    %672 = vmatprep.subr.mxu0 0.0
    %673 = vmatpush2.msra.mxu0 0.0
    %674 = vmatprep.subr.mxu0 0.0
    %675 = vmatpush2.msra.mxu0 0.0
    %676 = vmatprep.subr.mxu0 0.0
    %677 = vmatpush2.msra.mxu0 0.0
    %678 = vmatprep.subr.mxu0 0.0
    %679 = vmatpush2.msra.mxu0 0.0
    %680 = vmatprep.subr.mxu0 0.0
    %681 = vmatpush2.msra.mxu0 0.0
    %682 = vmatprep.mubr.f32.mxu0 0.0
    %683 = vmatmul.mubr.f32.gmra.mxu0 %v616
    %v684 = vpop.f32.mrf.mxu0
    %v685 = vadd.f32 0.0, %v684
    %v686 = vpop.f32.mrf.mxu0
    %687 = vdwg.mxu0
    %v688 = vsel %vm30, %v578, 0.0
    %689 = vadd.xlane.f32.xlu0 %v688
    %v690 = vpop.xlane.xlu0 %689
    %v691 = vmul.f32 %v578, %v578
    %v692 = vsel %vm30, %v691, 0.0
    %693 = vadd.xlane.f32.xlu0 %v692
    %v694 = vpop.xlane.xlu0 %693
    %v695 = vsel %vm30, %v685, 0.0
    %696 = vadd.xlane.f32.xlu0 %v695
    %v697 = vpop.xlane.xlu0 %696
    %v698 = vadd.f32 %v690, %v697
    %v699 = vmul.f32 %v685, %v685
    %v700 = vsel %vm30, %v699, 0.0
    %701 = vadd.xlane.f32.xlu0 %v700
    %v702 = vpop.xlane.xlu0 %701
    %v703 = vadd.f32 %v694, %v702
    %v704 = vmul.f32 %v698, 0.03125
    %v705 = vmul.f32 %v703, 0.03125
    %v706 = vmul.f32 %v704, %v704
    %v707 = vsub.f32 %v705, %v706
    %v708 = vmax.f32 %v707, 0.0
    %v709 = vld [vmem:[%s6] sm:$0xff]
    %v710 = vadd.f32 %v708, 1e-05
    %v711 = vrsqrt.pop %v710
    %v712 = vmul.f32 %v709, %v711
    %v713 = vld [vmem:[%s7] sm:$0xff]
    %v714 = vmul.f32 %v704, %v712
    %v715 = vsub.f32 %v713, %v714
    %717 = vset.pattern.permute.xlu0 0
    %718 = vperm.xlu0 %717, %v712
    %v719 = vpop.permute.xlu0 %718
    %v721 = vmul.f32 %v578, %v719
    %723 = vset.pattern.permute.xlu0 0
    %724 = vperm.xlu0 %723, %v715
    %v725 = vpop.permute.xlu0 %724
    %v727 = vadd.f32 %v721, %v725
    %v728 = vmax.f32 %v727, 0.0
    %v729 = vmul.f32 %v685, %v719
    %v730 = vadd.f32 %v729, %v725
    %v731 = vmax.f32 %v730, 0.0
    %732 = vst.msk [vmem:[#allocation4] sm:$0xff] %vm30, %v728
    %s733 = scalar_lea.vmem [#allocation4], 8
    %734 = vst.msk [vmem:[%s733] sm:$0xff] %vm30, %v731
    // Predicated region
    $region34: #{down_forward.1} parent=1 // pred_check
      _
    $region35: #{down_forward.1} parent=1 // pred_check_branch
      %736 = sbr.rel (0) target = $region37
    $region36: #{down_forward.1} parent=1 // pred_region
      %s738 = ssub.s32 256, 256
      %739 = vsyncadd [#allocation5], %s738
      %s740 = sshll.u32 [#allocation4], 4
      %s741 = int_to_ptr.vmem [resolvable:$true] %s740
      %746 = dma.vmem_to_hbm [thread:$0]  %s741, 256, %s8, [#allocation5], 128, 128, 8
    $region37: #{down_forward.1} parent=1 // pred_fallthru
      _
    // Predicated region
    $region38: #{down_forward.1} parent=1 // pred_check
      _
    $region39: #{down_forward.1} parent=1 // pred_check_branch
      %748 = sbr.rel (0) target = $region41
    $region40: #{down_forward.1} parent=1 // pred_region
      %749 = dma.done [#allocation5], 256
    $region41: #{down_forward.1} parent=1 // pred_fallthru
      _
    %750 = vsyncpa [#allocation5], 1

</llo_original>
